<compile_context>
chip_gen: v6e
topology: v6e:2x2x1
jax: 0.10.0
libtpu: 0.0.40
codegen_flags: <defaults>
</compile_context>

<pallas_src>
import functools

import jax
import jax.numpy as jnp
from jax.experimental import pallas as pl
from jax.experimental.pallas import tpu as pltpu

EPS = 1e-5


def _round_up(n, m):
    return ((n + m - 1) // m) * m


def _vmem_capacity_bytes():
    """Physical VMEM per TensorCore (128 MiB on v5e/v6e, 64 MiB on v7x)."""
    try:
        info = pltpu.get_tpu_info()
        cap = getattr(info, "vmem_capacity_bytes", None)
        if cap:
            return int(cap)
    except Exception:
        pass
    return 64 << 20  # conservative fallback (v7x per-TC) if the query fails


def prepare_gate_weight(w_gate):
    """One-time prep of the torch-layout gate weight (H_out, H_in).

    Returns the (H_in, H_out) bf16 operand the kernel consumes. Do this once at
    parameter-load time: the transpose + cast reads/writes ~6*H^2 bytes of HBM
    and must not be paid on every forward call.
    """
    return jnp.asarray(w_gate).T.astype(jnp.bfloat16)


# ----------------------------------------------------------------------------
# Kernel bodies
# ----------------------------------------------------------------------------
def _ln_gate_resident_kernel(x_ref, gamma_ref, beta_ref, w_ref, b_ref, out_ref,
                             *, tile, rows_total, mask_rows):
    # x_ref: (tile, H); gamma/beta/b: (1, H); w_ref: (H, H) bf16, already
    # transposed so `normed @ W + b` matches nn.Linear(normed).
    x = x_ref[...].astype(jnp.float32)
    if mask_rows:
        # Partial edge block: zero the garbage rows beyond the array end so the
        # (discarded) tail stays finite. Cheaper than padding x in HBM.
        row = (pl.program_id(0) * tile
               + jax.lax.broadcasted_iota(jnp.int32, x.shape, 0))
        x = jnp.where(row < rows_total, x, 0.0)

    # LayerNorm (biased variance, eps inside rsqrt — torch semantics), in f32.
    mean = jnp.mean(x, axis=-1, keepdims=True)
    xc = x - mean
    var = jnp.mean(xc * xc, axis=-1, keepdims=True)
    normed = (xc * jax.lax.rsqrt(var + EPS) * gamma_ref[...].astype(jnp.float32)
              + beta_ref[...].astype(jnp.float32))

    # Gate matmul on the MXU: bf16 operands, f32 accumulation. sigmoid's exp
    # goes to the EUP (separate VLIW slot).
    logits = jnp.dot(normed.astype(jnp.bfloat16), w_ref[...],
                     preferred_element_type=jnp.float32)
    gate = jax.nn.sigmoid(logits + b_ref[...].astype(jnp.float32))
    out_ref[...] = (gate * normed).astype(out_ref.dtype)


def _ln_gate_coltiled_kernel(x_ref, gamma_ref, beta_ref, w_ref, b_ref, out_ref,
                             normed_ref, *, tile, tn, hidden, rows_total,
                             mask_rows):
    # Column-tiled variant for large H (small-VMEM parts): W streams in
    # (H, tn) slabs along the innermost "arbitrary" grid axis; the LayerNorm is
    # computed once per row tile (j == 0) and cached in a bf16 VMEM scratch.
    j = pl.program_id(1)

    @pl.when(j == 0)
    def _():
        x = x_ref[...].astype(jnp.float32)
        if mask_rows:
            row = (pl.program_id(0) * tile
                   + jax.lax.broadcasted_iota(jnp.int32, x.shape, 0))
            x = jnp.where(row < rows_total, x, 0.0)
        mean = jnp.mean(x, axis=-1, keepdims=True)
        xc = x - mean
        var = jnp.mean(xc * xc, axis=-1, keepdims=True)
        normed = (xc * jax.lax.rsqrt(var + EPS)
                  * gamma_ref[...].astype(jnp.float32)
                  + beta_ref[...].astype(jnp.float32))
        normed_ref[:, :hidden] = normed.astype(jnp.bfloat16)

    if normed_ref.shape[-1] == hidden:
        lhs = normed_ref[...]
    else:
        lhs = normed_ref[:, :hidden]
    logits = jnp.dot(lhs, w_ref[...], preferred_element_type=jnp.float32)
    gate = jax.nn.sigmoid(logits + b_ref[...].astype(jnp.float32))

    col0 = pl.multiple_of(j * tn, tn)
    normed_slab = normed_ref[:, pl.ds(col0, tn)].astype(jnp.float32)
    out_ref[...] = (gate * normed_slab).astype(out_ref.dtype)


# ----------------------------------------------------------------------------
# Wrapper
# ----------------------------------------------------------------------------
def layer_norm_with_gating(x, gamma, beta, w_t_bf16, b_gate, *, row_tile=512):
    """x: [B, S, H]; gamma/beta/b_gate: [H];
    w_t_bf16: (H_in, H_out) bf16 from `prepare_gate_weight` (do the transpose +
    cast once at parameter load, not per call)."""
    B, S, H = x.shape
    rows = B * S
    x2d = x.reshape(rows, H)

    itemsize = jnp.dtype(x.dtype).itemsize
    sublane = {4: 8, 2: 16, 1: 32}.get(itemsize, 8)

    if w_t_bf16.dtype != jnp.bfloat16:
        # Fallback only; callers should pre-cast via prepare_gate_weight().
        w_t_bf16 = w_t_bf16.astype(jnp.bfloat16)
    assert w_t_bf16.shape == (H, H)

    gamma2d = gamma.reshape(1, H)
    beta2d = beta.reshape(1, H)
    b2d = b_gate.reshape(1, H)

    # --- hardware-aware VMEM budget ----------------------------------------
    cap = _vmem_capacity_bytes()
    budget = int(0.85 * cap)                      # headroom for Mosaic scratch
    max_tile = 1024 if cap >= (100 << 20) else 512  # 128 MiB parts vs v7x 64 MiB
    rows_aligned = _round_up(rows, sublane)
    desired = max(sublane,
                  min(_round_up(row_tile, sublane), rows_aligned, max_tile))

    # Footprint models: pipeline buffers + resident operands + in-kernel f32
    # temporaries. Used both to pick the tiling and to set vmem_limit_bytes.
    def resident_need(t):
        return (4 * t * H * itemsize      # x + out tiles, double-buffered
                + H * H * 2               # resident W (bf16, single-buffered)
                + 4 * t * H * 4           # f32 temporaries (x, xc/normed, logits/gate)
                + 16 * H * 4)             # gamma/beta/bias + slack

    def coltiled_need(t, tn):
        return (2 * t * H * itemsize      # x tiles, double-buffered
                + 2 * t * tn * itemsize   # out slabs, double-buffered
                + 2 * H * tn * 2          # W slabs (bf16), double-buffered
                + t * _round_up(H, tn) * 2  # normed bf16 scratch
                + 3 * t * H * 4           # f32 LayerNorm temporaries (j == 0)
                + 2 * t * tn * 4          # logits / gate
                + 16 * H * 4)

    # Candidate row tiles: desired, then halvings (kept sublane-aligned).
    cands = []
    t = desired
    while True:
        cands.append(t)
        if t <= sublane:
            break
        t = max(sublane, ((t // 2) // sublane) * sublane)

    resident_tile = None
    for t in cands:
        if resident_need(t) <= budget:
            resident_tile = t
            break

    # Resident-W is optimal (one HBM fetch of W, zero per-step W DMA) as long as
    # it still allows a decent row tile; otherwise stream W in column slabs.
    use_resident = (resident_tile is not None
                    and resident_tile >= min(desired, 256))
    const = pl.Buffered(1)   # constant-index operands: double-buffering buys nothing

    if use_resident:
        tile = resident_tile
        n_row = (rows + tile - 1) // tile
        mask_rows = (rows % tile) != 0
        need = resident_need(tile)
        vmem_limit = min(budget, max(32 << 20, int(1.2 * need) + (4 << 20)))

        kernel = functools.partial(_ln_gate_resident_kernel, tile=tile,
                                   rows_total=rows, mask_rows=mask_rows)
        cost = pl.CostEstimate(
            flops=2 * rows * H * H,
            transcendentals=rows * H,
            bytes_accessed=2 * rows * H * itemsize + H * H * 2 + 3 * H * 4)

        out2d = pl.pallas_call(
            kernel,
            out_shape=jax.ShapeDtypeStruct((rows, H), x.dtype),
            grid_spec=pltpu.PrefetchScalarGridSpec(
                num_scalar_prefetch=0,
                grid=(n_row,),
                in_specs=[
                    pl.BlockSpec((tile, H), lambda i: (i, 0)),                    # x rows
                    pl.BlockSpec((1, H), lambda i: (0, 0), pipeline_mode=const),  # gamma
                    pl.BlockSpec((1, H), lambda i: (0, 0), pipeline_mode=const),  # beta
                    pl.BlockSpec((H, H), lambda i: (0, 0), pipeline_mode=const),  # W^T (bf16)
                    pl.BlockSpec((1, H), lambda i: (0, 0), pipeline_mode=const),  # bias
                ],
                out_specs=pl.BlockSpec((tile, H), lambda i: (i, 0)),
            ),
            compiler_params=pltpu.CompilerParams(
                dimension_semantics=("parallel",),   # row axis shards across TCs
                vmem_limit_bytes=vmem_limit,
            ),
            cost_estimate=cost,
        )(x2d, gamma2d, beta2d, w_t_bf16, b2d)
        return out2d.reshape(B, S, H)

    # ---- column-tiled path: W doesn't comfortably fit resident -------------
    col_cfg = None
    for t in cands:
        for tn in (512, 256, 128):
            tn = min(tn, _round_up(H, 128))
            if coltiled_need(t, tn) <= budget:
                col_cfg = (t, tn)
                break
        if col_cfg is not None:
            break
    if col_cfg is None:
        col_cfg = (cands[-1], 128)   # best effort; let the compiler decide
    tile, tn = col_cfg

    n_row = (rows + tile - 1) // tile
    n_col = (H + tn - 1) // tn
    h_pad = n_col * tn
    mask_rows = (rows % tile) != 0
    need = coltiled_need(tile, tn)
    vmem_limit = min(budget, max(32 << 20, int(1.2 * need) + (4 << 20)))

    kernel = functools.partial(_ln_gate_coltiled_kernel, tile=tile, tn=tn,
                               hidden=H, rows_total=rows, mask_rows=mask_rows)
    cost = pl.CostEstimate(
        flops=2 * rows * H * H,
        transcendentals=rows * H,
        bytes_accessed=(2 * rows * H * itemsize   # x in + out
                        + n_row * H * h_pad * 2   # W re-streamed per row tile
                        + 3 * H * 4))

    out2d = pl.pallas_call(
        kernel,
        out_shape=jax.ShapeDtypeStruct((rows, H), x.dtype),
        grid_spec=pltpu.PrefetchScalarGridSpec(
            num_scalar_prefetch=0,
            grid=(n_row, n_col),   # column axis innermost so W slabs stream
            in_specs=[
                pl.BlockSpec((tile, H), lambda i, j: (i, 0)),                    # x rows
                pl.BlockSpec((1, H), lambda i, j: (0, 0), pipeline_mode=const),  # gamma
                pl.BlockSpec((1, H), lambda i, j: (0, 0), pipeline_mode=const),  # beta
                pl.BlockSpec((H, tn), lambda i, j: (0, j)),                      # W slab
                pl.BlockSpec((1, tn), lambda i, j: (0, j)),                      # bias slab
            ],
            out_specs=pl.BlockSpec((tile, tn), lambda i, j: (i, j)),
            scratch_shapes=[pltpu.VMEM((tile, h_pad), jnp.bfloat16)],            # cached normed
        ),
        compiler_params=pltpu.CompilerParams(
            dimension_semantics=("parallel", "arbitrary"),
            vmem_limit_bytes=vmem_limit,
        ),
        cost_estimate=cost,
    )(x2d, gamma2d, beta2d, w_t_bf16, b2d)
    return out2d.reshape(B, S, H)


def _reference(x, gamma, beta, w_gate, b_gate):
    xf = x.astype(jnp.float32)
    mean = jnp.mean(xf, axis=-1, keepdims=True)
    var = jnp.mean((xf - mean) ** 2, axis=-1, keepdims=True)
    normed = (xf - mean) * jax.lax.rsqrt(var + EPS) * gamma + beta
    gate = jax.nn.sigmoid(normed @ w_gate.T + b_gate)
    return (gate * normed).astype(x.dtype)


if __name__ == "__main__":
    B, S, H = 2, 8, 32
    key = jax.random.PRNGKey(0)
    kx, kw, kb = jax.random.split(key, 3)

    x = jax.random.normal(kx, (B, S, H), dtype=jnp.float32)

    # Deterministic parameter init (nn.LayerNorm: gamma=1, beta=0;
    # nn.Linear: uniform(-1/sqrt(H), 1/sqrt(H)) — reproduced with JAX PRNG).
    gamma = jnp.ones((H,), jnp.float32)
    beta = jnp.zeros((H,), jnp.float32)
    bound = 1.0 / (H ** 0.5)
    w_gate = jax.random.uniform(kw, (H, H), jnp.float32, -bound, bound)  # torch (H_out, H_in)
    b_gate = jax.random.uniform(kb, (H,), jnp.float32, -bound, bound)

    w_t = prepare_gate_weight(w_gate)   # one-time transpose + bf16 cast (hoisted)

    out = layer_norm_with_gating(x, gamma, beta, w_t, b_gate)
    out = jax.block_until_ready(out)

    ref = _reference(x, gamma, beta, w_gate, b_gate)
    # Gate matmul runs on the MXU in bf16 (accumulated in f32), so compare
    # against the f32 reference with a bf16-appropriate tolerance.
    assert jnp.allclose(out, ref, atol=2e-2, rtol=2e-2), "mismatch vs reference"

    print("KERNEL_OK")
</pallas_src>

<mosaic_0001>
module attributes {stable_mosaic.version = 11 : i64} {
  func.func @_ln_gate_resident_kernel(%arg0: i32, %arg1: memref<16x32xf32, #tpu.memory_space<vmem>>, %arg2: memref<1x32xf32, #tpu.memory_space<vmem>>, %arg3: memref<1x32xf32, #tpu.memory_space<vmem>>, %arg4: memref<32x32xbf16, #tpu.memory_space<vmem>>, %arg5: memref<1x32xf32, #tpu.memory_space<vmem>>, %arg6: memref<16x32xf32, #tpu.memory_space<vmem>>) attributes {dimension_semantics = [#tpu.dimension_semantics<parallel>], iteration_bounds = array<i64: 1>, scalar_prefetch = 0 : i64, scratch_operands = 0 : i64, tpu.core_type = #tpu.core_type<tc>, window_params = [{transform_indices = @transform_0, window_bounds = array<i64: 16, 32>}, {pipeline_mode = #tpu.pipeline_mode<synchronous>, transform_indices = @transform_1, window_bounds = array<i64: 1, 32>}, {pipeline_mode = #tpu.pipeline_mode<synchronous>, transform_indices = @transform_2, window_bounds = array<i64: 1, 32>}, {pipeline_mode = #tpu.pipeline_mode<synchronous>, transform_indices = @transform_3, window_bounds = array<i64: 32, 32>}, {pipeline_mode = #tpu.pipeline_mode<synchronous>, transform_indices = @transform_4, window_bounds = array<i64: 1, 32>}, {transform_indices = @transform_5, window_bounds = array<i64: 16, 32>}]} {
    %c0 = arith.constant 0 : index
    %c0_0 = arith.constant 0 : index
    %0 = vector.load %arg1[%c0, %c0_0] : memref<16x32xf32, #tpu.memory_space<vmem>>, vector<16x32xf32>
    %cst = arith.constant dense<0.000000e+00> : vector<16xf32>
    %1 = vector.multi_reduction <add>, %0, %cst [1] : vector<16x32xf32> to vector<16xf32>
    %2 = vector.shape_cast %1 : vector<16xf32> to vector<16x1xf32>
    %cst_1 = arith.constant 3.200000e+01 : f32
    %3 = vector.broadcast %cst_1 : f32 to vector<16x1xf32>
    %4 = arith.divf %2, %3 : vector<16x1xf32>
    %5 = vector.broadcast %4 : vector<16x1xf32> to vector<16x32xf32>
    %6 = arith.subf %0, %5 : vector<16x32xf32>
    %7 = arith.mulf %6, %6 : vector<16x32xf32>
    %cst_2 = arith.constant dense<0.000000e+00> : vector<16xf32>
    %8 = vector.multi_reduction <add>, %7, %cst_2 [1] : vector<16x32xf32> to vector<16xf32>
    %9 = vector.shape_cast %8 : vector<16xf32> to vector<16x1xf32>
    %cst_3 = arith.constant 3.200000e+01 : f32
    %10 = vector.broadcast %cst_3 : f32 to vector<16x1xf32>
    %11 = arith.divf %9, %10 : vector<16x1xf32>
    %cst_4 = arith.constant 9.99999974E-6 : f32
    %12 = vector.broadcast %cst_4 : f32 to vector<16x1xf32>
    %13 = arith.addf %11, %12 : vector<16x1xf32>
    %14 = math.rsqrt %13 : vector<16x1xf32>
    %15 = vector.broadcast %14 : vector<16x1xf32> to vector<16x32xf32>
    %16 = arith.mulf %6, %15 : vector<16x32xf32>
    %c0_5 = arith.constant 0 : index
    %c0_6 = arith.constant 0 : index
    %17 = vector.load %arg2[%c0_5, %c0_6] : memref<1x32xf32, #tpu.memory_space<vmem>>, vector<1x32xf32>
    %18 = vector.broadcast %17 : vector<1x32xf32> to vector<16x32xf32>
    %19 = arith.mulf %16, %18 : vector<16x32xf32>
    %c0_7 = arith.constant 0 : index
    %c0_8 = arith.constant 0 : index
    %20 = vector.load %arg3[%c0_7, %c0_8] : memref<1x32xf32, #tpu.memory_space<vmem>>, vector<1x32xf32>
    %21 = vector.broadcast %20 : vector<1x32xf32> to vector<16x32xf32>
    %22 = arith.addf %19, %21 : vector<16x32xf32>
    %23 = arith.truncf %22 : vector<16x32xf32> to vector<16x32xbf16>
    %c0_9 = arith.constant 0 : index
    %c0_10 = arith.constant 0 : index
    %24 = vector.load %arg4[%c0_9, %c0_10] : memref<32x32xbf16, #tpu.memory_space<vmem>>, vector<32x32xbf16>
    %cst_11 = arith.constant dense<0.000000e+00> : vector<16x32xf32>
    %25 = tpu.matmul %23, %24, %cst_11 {dimension_numbers = #tpu.dot_dimension_numbers<[1], [0], [0], [1], [0, 0, 1, 1], [], []>} : vector<16x32xbf16>, vector<32x32xbf16>, vector<16x32xf32> -> vector<16x32xf32>
    %c0_12 = arith.constant 0 : index
    %c0_13 = arith.constant 0 : index
    %26 = vector.load %arg5[%c0_12, %c0_13] : memref<1x32xf32, #tpu.memory_space<vmem>>, vector<1x32xf32>
    %27 = vector.broadcast %26 : vector<1x32xf32> to vector<16x32xf32>
    %28 = arith.addf %25, %27 : vector<16x32xf32>
    %29 = arith.negf %28 : vector<16x32xf32>
    %30 = math.exp %29 : vector<16x32xf32>
    %cst_14 = arith.constant 1.000000e+00 : f32
    %31 = vector.broadcast %cst_14 : f32 to vector<16x32xf32>
    %32 = arith.addf %31, %30 : vector<16x32xf32>
    %33 = arith.divf %31, %32 : vector<16x32xf32>
    %34 = arith.mulf %33, %22 : vector<16x32xf32>
    %c0_15 = arith.constant 0 : index
    %c0_16 = arith.constant 0 : index
    %35 = vector.load %arg6[%c0_15, %c0_16] : memref<16x32xf32, #tpu.memory_space<vmem>>, vector<16x32xf32>
    tpu.vector_store %arg6[%c0_15, %c0_16], %34 {strides = array<i32>} : memref<16x32xf32, #tpu.memory_space<vmem>>, vector<16x32xf32>,
    return
  }
  func.func @transform_0(%arg0: i32) -> (i32, i32) {
    %c0_i32 = arith.constant 0 : i32
    %c0_i32_0 = arith.constant 0 : i32
    return %arg0, %c0_i32 : i32, i32
  }
  func.func @transform_1(%arg0: i32) -> (i32, i32) {
    %c0_i32 = arith.constant 0 : i32
    %c0_i32_0 = arith.constant 0 : i32
    %c0_i32_1 = arith.constant 0 : i32
    return %c0_i32, %c0_i32_0 : i32, i32
  }
  func.func @transform_2(%arg0: i32) -> (i32, i32) {
    %c0_i32 = arith.constant 0 : i32
    %c0_i32_0 = arith.constant 0 : i32
    %c0_i32_1 = arith.constant 0 : i32
    return %c0_i32, %c0_i32_0 : i32, i32
  }
  func.func @transform_3(%arg0: i32) -> (i32, i32) {
    %c0_i32 = arith.constant 0 : i32
    %c0_i32_0 = arith.constant 0 : i32
    %c0_i32_1 = arith.constant 0 : i32
    return %c0_i32, %c0_i32_0 : i32, i32
  }
  func.func @transform_4(%arg0: i32) -> (i32, i32) {
    %c0_i32 = arith.constant 0 : i32
    %c0_i32_0 = arith.constant 0 : i32
    %c0_i32_1 = arith.constant 0 : i32
    return %c0_i32, %c0_i32_0 : i32, i32
  }
  func.func @transform_5(%arg0: i32) -> (i32, i32) {
    %c0_i32 = arith.constant 0 : i32
    %c0_i32_0 = arith.constant 0 : i32
    return %arg0, %c0_i32 : i32, i32
  }
}

</mosaic_0001>

<llo_original>
// kernel: tpu_custom_call.1
$region0: #{tpu_custom_call.1}
  #allocation0 [shape = 'u32[]', space=smem, size = 0x4, offset = 0x4, fixed_abs, tag = 'smem constant byte address 0x4 - core index']
  #allocation1 [shape = 'u32[144,128]{1,0:T(1,128)}', space=vmem, size = 0x12000, scoped, tag = 'internal scratch']
  %s0 = inlined_call_operand.hbm [shape: f32[16,32], index: 0, kind: input, shape index: {}]
  %s1 = inlined_call_operand.vmem [shape: f32[1,32], index: 1, kind: input, shape index: {}]
  %s2 = inlined_call_operand.vmem [shape: f32[1,32], index: 2, kind: input, shape index: {}]
  %s3 = inlined_call_operand.hbm [shape: bf16[32,32], index: 3, kind: input, shape index: {}]
  %s4 = inlined_call_operand.vmem [shape: f32[1,32], index: 4, kind: input, shape index: {}]
  %s5 = inlined_call_operand.hbm [shape: f32[16,32], index: 5, kind: output, shape index: {}]
  %s6 = sld [smem:[#allocation0]]
  $region38: #{tpu_custom_call.1} parent=0
    _
  %s8 = ssub.s32 1, %s6
  %s9 = scalar_select 0, %s8, %s6
  $region1: #{tpu_custom_call.1} parent=0
    #allocation2 [shape = 'u8[8192]{0}', space=vmem, size = 0x2000, scoped, tag = 'input window, operand 0, single buffered']
    #allocation3 [shape = 's32[1]{0}', space=sflag, size = 0x4, scoped, tag = 'scoped memory for tpu_custom_call.1']
    #allocation4 [shape = 's32[1]{0}', space=sflag, size = 0x4, scoped, tag = 'scoped memory for tpu_custom_call.1']
    #allocation5 [shape = 'u8[8192]{0}', space=vmem, size = 0x2000, scoped, tag = 'input window, operand 3, single buffered']
    #allocation6 [shape = 's32[1]{0}', space=sflag, size = 0x4, scoped, tag = 'scoped memory for tpu_custom_call.1']
    #allocation7 [shape = 'u8[8192]{0}', space=vmem, size = 0x2000, scoped, tag = 'output window, operand 0, single buffered']
    %10 = vsyncpa [#allocation3], 0
    %11 = vsyncpa [#allocation6], 0
    %12 = vsyncpa [#allocation4], 0
    // Predicated region
    $region2: #{tpu_custom_call.1} parent=1 // pred_check
      _
    $region3: #{tpu_custom_call.1} parent=1 // pred_check_branch
      %14 = sbr.rel (0) target = $region5
    $region4: #{tpu_custom_call.1} parent=1 // pred_region
      %s16 = ssub.s32 256, 256
      %17 = vsyncadd [#allocation3], %s16
      %s18 = sshll.u32 [#allocation2], 4
      %s19 = int_to_ptr.vmem [resolvable:$true] %s18
      %24 = dma.hbm_to_vmem [thread:$0]  %s0, 256, %s19, [#allocation3], 128, 128, 8
    $region5: #{tpu_custom_call.1} parent=1 // pred_fallthru
      _
    // Predicated region
    $region6: #{tpu_custom_call.1} parent=1 // pred_check
      _
    $region7: #{tpu_custom_call.1} parent=1 // pred_check_branch
      %26 = sbr.rel (0) target = $region9
    $region8: #{tpu_custom_call.1} parent=1 // pred_region
      _
    $region9: #{tpu_custom_call.1} parent=1 // pred_fallthru
      _
    // Predicated region
    $region10: #{tpu_custom_call.1} parent=1 // pred_check
      _
    $region11: #{tpu_custom_call.1} parent=1 // pred_check_branch
      %28 = sbr.rel (0) target = $region13
    $region12: #{tpu_custom_call.1} parent=1 // pred_region
      _
    $region13: #{tpu_custom_call.1} parent=1 // pred_fallthru
      _
    // Predicated region
    $region14: #{tpu_custom_call.1} parent=1 // pred_check
      _
    $region15: #{tpu_custom_call.1} parent=1 // pred_check_branch
      %30 = sbr.rel (0) target = $region17
    $region16: #{tpu_custom_call.1} parent=1 // pred_region
      %s32 = ssub.s32 256, 256
      %33 = vsyncadd [#allocation6], %s32
      %s34 = sshll.u32 [#allocation5], 4
      %s35 = int_to_ptr.vmem [resolvable:$true] %s34
      %40 = dma.hbm_to_vmem [thread:$0]  %s3, 256, %s35, [#allocation6], 64, 64, 4
    $region17: #{tpu_custom_call.1} parent=1 // pred_fallthru
      _
    // Predicated region
    $region18: #{tpu_custom_call.1} parent=1 // pred_check
      _
    $region19: #{tpu_custom_call.1} parent=1 // pred_check_branch
      %42 = sbr.rel (0) target = $region21
    $region20: #{tpu_custom_call.1} parent=1 // pred_region
      _
    $region21: #{tpu_custom_call.1} parent=1 // pred_fallthru
      _
    // Predicated region
    $region22: #{tpu_custom_call.1} parent=1 // pred_check
      _
    $region23: #{tpu_custom_call.1} parent=1 // pred_check_branch
      %44 = sbr.rel (0) target = $region25
    $region24: #{tpu_custom_call.1} parent=1 // pred_region
      %45 = dma.done [#allocation3], 256
    $region25: #{tpu_custom_call.1} parent=1 // pred_fallthru
      _
    // Predicated region
    $region26: #{tpu_custom_call.1} parent=1 // pred_check
      _
    $region27: #{tpu_custom_call.1} parent=1 // pred_check_branch
      %47 = sbr.rel (0) target = $region29
    $region28: #{tpu_custom_call.1} parent=1 // pred_region
      %48 = dma.done [#allocation6], 256
    $region29: #{tpu_custom_call.1} parent=1 // pred_fallthru
      _
    %v50 = vld [vmem:[#allocation2] sm:$0xff]
    %v51 = vld [vmem:[#allocation2 + $0x8] sm:$0xff]
    %vm52 = vcmask 261120
    %v53 = vsel %vm52, %v50, 0.0
    %54 = vadd.xlane.f32.xlu0 %v53
    %v55 = vpop.xlane.xlu0 %54
    %v56 = vsel %vm52, %v51, 0.0
    %57 = vadd.xlane.f32.xlu0 %v56
    %v58 = vpop.xlane.xlu0 %57
    %v59 = vrcp.pop 32.0
    %v60 = vmul.f32 %v55, %v59
    %v61 = vmul.f32 %v58, %v59
    %v62 = vsub.f32 %v50, %v60
    %v63 = vsub.f32 %v51, %v61
    %v64 = vmul.f32 %v62, %v62
    %v65 = vmul.f32 %v63, %v63
    %v66 = vsel %vm52, %v64, 0.0
    %67 = vadd.xlane.f32.xlu0 %v66
    %v68 = vpop.xlane.xlu0 %67
    %v69 = vsel %vm52, %v65, 0.0
    %70 = vadd.xlane.f32.xlu0 %v69
    %v71 = vpop.xlane.xlu0 %70
    %v72 = vmul.f32 %v68, %v59
    %v73 = vmul.f32 %v71, %v59
    %v74 = vadd.f32 %v72, 1e-05
    %v75 = vadd.f32 %v73, 1e-05
    %v76 = vrsqrt.pop %v74
    %v77 = vrsqrt.pop %v75
    %v78 = vmul.f32 %v62, %v76
    %v79 = vmul.f32 %v63, %v77
    %v80 = vld [vmem:[%s1] sm:$0x1]
    %v82 = vlaneseq
    %v83 = vshrl.u32 %v82, 7
    %v84 = vsub.s32 0, %v83
    %v85 = vrot.slane %v80, %v84
    %v87 = vmul.f32 %v78, %v85
    %v88 = vmul.f32 %v79, %v85
    %v89 = vld [vmem:[%s2] sm:$0x1]
    %v91 = vlaneseq
    %v92 = vshrl.u32 %v91, 7
    %v93 = vsub.s32 0, %v92
    %v94 = vrot.slane %v89, %v93
    %v96 = vadd.f32 %v87, %v94
    %v97 = vadd.f32 %v88, %v94
    %v98 = vpack.c.bf16 %v97, %v96
    %v99 = vld [vmem:[#allocation5] sm:$0xf]
    %v100 = vld [vmem:[#allocation5 + $0x4] sm:$0xf]
    %v101 = vld [vmem:[#allocation5 + $0x8] sm:$0xf]
    %v102 = vld [vmem:[#allocation5 + $0xc] sm:$0xf]
    %v103 = vld [vmem:[%s4] sm:$0x1]
    %v105 = vlaneseq
    %v106 = vshrl.u32 %v105, 7
    %v107 = vsub.s32 0, %v106
    %v108 = vrot.slane %v103, %v107
    %v114 = vunpack.c.l.b16 %v99
    %v115 = vunpack.c.l.b16 %v100
    %v116 = vunpack.c.l.b16 %v101
    %v117 = vunpack.c.l.b16 %v102
    %v118 = vpack.c.b16 %v115, %v114
    %v119 = vpack.c.b16 %v117, %v116
    %v123 = vsel %vm52, %v98, 0
    %125 = vmatprep.subr.bf16.mxu0 0
    %126 = vmatpush1.bf16.msra.mxu0 0
    %127 = vmatprep.subr.bf16.mxu0 0
    %128 = vmatpush1.bf16.msra.mxu0 0
    %129 = vmatprep.subr.bf16.mxu0 0
    %130 = vmatpush1.bf16.msra.mxu0 0
    %131 = vmatprep.subr.bf16.mxu0 0
    %132 = vmatpush1.bf16.msra.mxu0 0
    %133 = vmatprep.subr.bf16.mxu0 0
    %134 = vmatpush1.bf16.msra.mxu0 0
    %135 = vmatprep.subr.bf16.mxu0 0
    %136 = vmatpush1.bf16.msra.mxu0 0
    %137 = vmatprep.subr.bf16.mxu0 0
    %138 = vmatpush1.bf16.msra.mxu0 %v119
    %139 = vmatprep.subr.bf16.mxu0 0
    %140 = vmatpush1.bf16.msra.mxu0 %v118
    %141 = vmatprep.subr.bf16.mxu0 0
    %142 = vmatpush2.bf16.msra.mxu0 0
    %143 = vmatprep.subr.bf16.mxu0 0
    %144 = vmatpush2.bf16.msra.mxu0 0
    %145 = vmatprep.subr.bf16.mxu0 0
    %146 = vmatpush2.bf16.msra.mxu0 0
    %147 = vmatprep.subr.bf16.mxu0 0
    %148 = vmatpush2.bf16.msra.mxu0 0
    %149 = vmatprep.subr.bf16.mxu0 0
    %150 = vmatpush2.bf16.msra.mxu0 0
    %151 = vmatprep.subr.bf16.mxu0 0
    %152 = vmatpush2.bf16.msra.mxu0 0
    %153 = vmatprep.subr.bf16.mxu0 0
    %154 = vmatpush2.bf16.msra.mxu0 0
    %155 = vmatprep.subr.bf16.mxu0 0
    %156 = vmatpush2.bf16.msra.mxu0 0
    %157 = vmatprep.mubr.bf16.mxu0 0
    %158 = vmatmul.mubr.bf16.gmra.mxu0 %v123
    %v159 = vpop.f32.mrf.mxu0
    %v160 = vadd.f32 %v108, %v159
    %v161 = vpop.f32.mrf.mxu0
    %v162 = vpop.f32.mrf.mxu0
    %v163 = vadd.f32 %v108, %v162
    %v164 = vpop.f32.mrf.mxu0
    %165 = vdwg.mxu0
    %v166 = vxor.u32 %v160, 2147483648
    %v167 = vxor.u32 %v163, 2147483648
    %v168 = vmul.f32 %v166, 1.442695
    %v169 = vpow.pop %v168
    %v170 = vmul.f32 %v167, 1.442695
    %v171 = vpow.pop %v170
    %v172 = vadd.f32 %v169, 1.0
    %v173 = vadd.f32 %v171, 1.0
    %v174 = vrcp.pop %v172
    %v175 = vmul.f32 1.0, %v174
    %v176 = vrcp.pop %v173
    %v177 = vmul.f32 1.0, %v176
    %v178 = vmul.f32 %v175, %v96
    %v179 = vmul.f32 %v177, %v97
    %180 = vst.msk [vmem:[#allocation7] sm:$0xff] %vm52, %v178
    %181 = vst.msk [vmem:[#allocation7 + $0x8] sm:$0xff] %vm52, %v179
    // Predicated region
    $region30: #{tpu_custom_call.1} parent=1 // pred_check
      _
    $region31: #{tpu_custom_call.1} parent=1 // pred_check_branch
      %183 = sbr.rel (0) target = $region33
    $region32: #{tpu_custom_call.1} parent=1 // pred_region
      %s185 = ssub.s32 256, 256
      %186 = vsyncadd [#allocation4], %s185
      %s187 = sshll.u32 [#allocation7], 4
      %s188 = int_to_ptr.vmem [resolvable:$true] %s187
      %193 = dma.vmem_to_hbm [thread:$0]  %s188, 256, %s5, [#allocation4], 128, 128, 8
    $region33: #{tpu_custom_call.1} parent=1 // pred_fallthru
      _
    // Predicated region
    $region34: #{tpu_custom_call.1} parent=1 // pred_check
      _
    $region35: #{tpu_custom_call.1} parent=1 // pred_check_branch
      %195 = sbr.rel (0) target = $region37
    $region36: #{tpu_custom_call.1} parent=1 // pred_region
      %196 = dma.done [#allocation4], 256
    $region37: #{tpu_custom_call.1} parent=1 // pred_fallthru
      _
    %197 = vsyncpa [#allocation3], 1
    %198 = vsyncpa [#allocation6], 1
    %199 = vsyncpa [#allocation4], 1

</llo_original>
